<compile_context>
chip_gen: v6e
topology: v6e:2x2x1
jax: 0.10.0
libtpu: 0.0.40
codegen_flags: <defaults>
</compile_context>

<pallas_src>
import functools

import jax
import jax.numpy as jnp
from jax.experimental import pallas as pl
from jax.experimental.pallas import tpu as pltpu

GAMMA = 20          # module default
LAMBDA_INV = 25.0   # module default

_LANE = 128


def _round_up(x, m):
    return ((x + m - 1) // m) * m


def _vmem_capacity_bytes():
    """Physical VMEM per TensorCore; conservative fallback if the query fails."""
    try:
        info = pltpu.get_tpu_info()
        for attr in ("vmem_capacity_bytes", "vmem_bytes", "vmem_size_bytes"):
            v = getattr(info, attr, None)
            if v:
                return int(v)
    except Exception:
        pass
    return 64 << 20  # v7x physical VMEM per TC (smallest of the three generations)


def _pick_batch_tile(B, Pp, Dp, z_bytes, budget_bytes, target_steps=8):
    """Largest divisor of B whose per-step footprint fits the VMEM budget, preferring
    >= target_steps grid steps (pipeline depth + v7x's 2 TensorCores) and an even grid
    so the 'parallel' batch axis splits cleanly across cores."""
    per_b = (
        2 * Pp * Dp * z_bytes        # double-buffered z tile (bf16 by default)
        + Pp * Pp * 4                # f32 sim slab
        + Pp * Pp * 4                # i32 argmax tie-break temporary
        + Pp * Pp                    # mask / select slack
        + 2 * 2 * Pp * 4             # double-buffered lane-dense outputs
    )
    cap = max(1, budget_bytes // max(per_b, 1))
    divisors = [d for d in range(1, B + 1) if B % d == 0]
    fitting = [d for d in divisors if d <= cap] or [1]

    def score(d):
        g = B // d
        enough = g >= min(target_steps, B)
        even = (g % 2 == 0) or (g == 1)
        return (enough, even, d)

    return max(fitting, key=score)


def _sim_argmax_kernel(z_ref, vrow_ref, vcol_ref, best_sim_ref, best_j_ref, *, p_real):
    # z_ref:        (Bt, Pp, Dp)  batch tile of (padded) patch features
    # vrow_ref:     (1, Pp)       int32 view id per candidate patch (column layout)
    # vcol_ref:     (Pp, 1)       int32 view id per anchor patch (row layout)
    # best_sim_ref: (1, Bt, Pp)   best valid similarity per anchor patch (lane-dense)
    # best_j_ref:   (1, Bt, Pp)   argmax candidate index per anchor patch (lane-dense)
    Pp = z_ref.shape[1]

    zb = z_ref[...]                                                 # bf16 (default)
    sim = jnp.einsum("bpd,bqd->bpq", zb, zb,
                     preferred_element_type=jnp.float32)            # (Bt, Pp, Pp) f32

    # Valid pair: candidate is a real (non-pad) patch from a different view.
    # A patch shares its own view id, so the diagonal is masked for free.
    col_real = jax.lax.broadcasted_iota(jnp.int32, (1, Pp), 1) < p_real
    valid = (vcol_ref[...] != vrow_ref[...]) & col_real              # (Pp, Pp)

    # -inf sentinel: masked / pad columns can never win the argmax.
    sim = jnp.where(valid[None], sim, -jnp.inf)

    row_max = jnp.max(sim, axis=2, keepdims=True)                    # (Bt, Pp, 1)
    # First-max tie-break with a broadcast (1,1,Pp) iota (no full-size index slab).
    cand = jax.lax.broadcasted_iota(jnp.int32, (1, 1, Pp), 2)
    row_arg = jnp.min(jnp.where(sim == row_max, cand, jnp.int32(Pp)), axis=2)

    # torch fills masked entries with -1.0, so best_sim == max(valid_max, -1.0);
    # rows with no valid pair report -1.0 (and argmax 0), matching the reference.
    best_sim_ref[...] = jnp.maximum(row_max[..., 0], jnp.float32(-1.0))[None]
    best_j_ref[...] = row_arg[None]


def _best_pairs_pallas(z, view_ids, use_bf16=True):
    B, P, D = z.shape
    Pp = _round_up(P, _LANE)
    Dp = _round_up(D, _LANE)

    in_dtype = jnp.bfloat16 if use_bf16 else jnp.float32
    zi = z.astype(in_dtype)
    if (Pp, Dp) != (P, D):
        zi = jnp.pad(zi, ((0, 0), (0, Pp - P), (0, Dp - D)))
    v = view_ids.astype(jnp.int32)
    if Pp != P:
        v = jnp.pad(v, (0, Pp - P))
    vrow = v.reshape(1, Pp)
    vcol = v.reshape(Pp, 1)

    z_bytes = jnp.dtype(in_dtype).itemsize
    vmem_cap = _vmem_capacity_bytes()
    step_budget = max(8 << 20, int(vmem_cap * 0.40))     # big tiles on v5e/v6e, safe on v7x
    bt = _pick_batch_tile(B, Pp, Dp, z_bytes, step_budget)
    g = B // bt
    vmem_limit = int(min(vmem_cap * 0.9, max(step_budget * 1.5, 32 << 20)))

    cost = pl.CostEstimate(
        flops=2 * B * Pp * Pp * Dp,
        transcendentals=0,
        bytes_accessed=B * Pp * Dp * z_bytes + B * Pp * 8 + Pp * 8,
    )

    best_sim_t, best_j_t = pl.pallas_call(
        functools.partial(_sim_argmax_kernel, p_real=P),
        grid=(g,),
        in_specs=[
            pl.BlockSpec((bt, Pp, Dp), lambda i: (i, 0, 0)),
            pl.BlockSpec((1, Pp), lambda i: (0, 0)),
            pl.BlockSpec((Pp, 1), lambda i: (0, 0)),
        ],
        out_specs=[
            pl.BlockSpec((1, bt, Pp), lambda i: (i, 0, 0)),
            pl.BlockSpec((1, bt, Pp), lambda i: (i, 0, 0)),
        ],
        out_shape=[
            jax.ShapeDtypeStruct((g, bt, Pp), jnp.float32),
            jax.ShapeDtypeStruct((g, bt, Pp), jnp.int32),
        ],
        compiler_params=pltpu.CompilerParams(
            dimension_semantics=("parallel",),
            vmem_limit_bytes=vmem_limit,
        ),
        cost_estimate=cost,
    )(zi, vrow, vcol)

    best_sim = best_sim_t.reshape(B, Pp)[:, :P]
    best_j = best_j_t.reshape(B, Pp)[:, :P]
    return best_sim, best_j


def _best_pairs_xla(z, view_ids):
    """Plain-XLA path for tiny problems where pallas_call overhead dominates."""
    zf = z.astype(jnp.float32)
    sim = jnp.einsum("bpd,bqd->bpq", zf, zf)
    v = view_ids.astype(jnp.int32)
    valid = v[:, None] != v[None, :]           # same-view (incl. diagonal) masked
    sim = jnp.where(valid[None], sim, -1.0)
    return sim.max(axis=2), sim.argmax(axis=2).astype(jnp.int32)


@functools.partial(jax.jit,
                   static_argnames=("gamma", "lambda_inv", "use_pallas", "use_bf16"))
def feature_match_simple_loss(z, view_ids, gamma=GAMMA, lambda_inv=LAMBDA_INV,
                              use_pallas=None, use_bf16=True):
    B, P, D = z.shape
    if use_pallas is None:
        # Below ~4M MACs the pallas_call launch + per-step overhead dominates.
        use_pallas = (B * P * P * D) >= (1 << 22)

    if use_pallas:
        best_sim, best_j = _best_pairs_pallas(z, view_ids, use_bf16=use_bf16)
    else:
        best_sim, best_j = _best_pairs_xla(z, view_ids)

    # ---- glue: top-gamma selection + pair gather (data-dependent indexing) ----
    # XLA fuses this for free; the final loss uses the original f32 features.
    z_flat = z.astype(jnp.float32).reshape(-1, D)          # (B*P, D)
    offsets = jnp.arange(B, dtype=jnp.int32)[:, None] * P
    best_j_flat = (best_j + offsets).reshape(-1)           # (B*P,)
    best_sim_flat = best_sim.reshape(-1)                   # (B*P,)

    topk_vals, topk_idx = jax.lax.top_k(best_sim_flat, gamma)
    z1 = z_flat[topk_idx]                                  # anchors == arange(B*P)[topk_idx]
    z2 = z_flat[best_j_flat[topk_idx]]

    diff = z1 - z2
    loss = lambda_inv * jnp.mean(diff * diff)
    avg_cos = jnp.mean(topk_vals)

    return {"loss_fmatch": loss, "fmatch_avg_cos": avg_cos}


if __name__ == "__main__":
    key = jax.random.PRNGKey(0)
    B, P, D = 2, 16, 32          # B*P = 32 >= GAMMA = 20

    z = jax.random.normal(key, (B, P, D), dtype=jnp.float32)
    # L2-normalize patch features (cosine-style embeddings, like VicRegL usage)
    z = z / jnp.linalg.norm(z, axis=-1, keepdims=True)

    # two views: first half of patches from view 0, second half from view 1
    view_ids = jnp.array([0] * (P // 2) + [1] * (P // 2), dtype=jnp.int32)

    # Force the Pallas path so the kernel is exercised even at these toy shapes.
    out = feature_match_simple_loss(z, view_ids, use_pallas=True)
    jax.block_until_ready(out)
    assert out["loss_fmatch"].shape == () and out["fmatch_avg_cos"].shape == ()
    assert bool(jnp.isfinite(out["loss_fmatch"])) and bool(jnp.isfinite(out["fmatch_avg_cos"]))
    print("KERNEL_OK")
</pallas_src>

<mosaic_0001>
module attributes {stable_mosaic.version = 11 : i64} {
  func.func @_sim_argmax_kernel(%arg0: i32, %arg1: memref<1x128x128xbf16, #tpu.memory_space<vmem>>, %arg2: memref<1x128xi32, #tpu.memory_space<vmem>>, %arg3: memref<128x1xi32, #tpu.memory_space<vmem>>, %arg4: memref<1x1x128xf32, #tpu.memory_space<vmem>>, %arg5: memref<1x1x128xi32, #tpu.memory_space<vmem>>) attributes {dimension_semantics = [#tpu.dimension_semantics<parallel>], iteration_bounds = array<i64: 2>, scalar_prefetch = 0 : i64, scratch_operands = 0 : i64, tpu.core_type = #tpu.core_type<tc>, window_params = [{transform_indices = @transform_0, window_bounds = array<i64: 1, 128, 128>}, {pipeline_mode = #tpu.pipeline_mode<synchronous>, transform_indices = @transform_1, window_bounds = array<i64: 1, 128>}, {pipeline_mode = #tpu.pipeline_mode<synchronous>, transform_indices = @transform_2, window_bounds = array<i64: 128, 1>}, {transform_indices = @transform_3, window_bounds = array<i64: 1, 1, 128>}, {transform_indices = @transform_4, window_bounds = array<i64: 1, 1, 128>}]} {
    %c0 = arith.constant 0 : index
    %c0_0 = arith.constant 0 : index
    %c0_1 = arith.constant 0 : index
    %0 = vector.load %arg1[%c0, %c0_0, %c0_1] : memref<1x128x128xbf16, #tpu.memory_space<vmem>>, vector<1x128x128xbf16>
    "tpu.trace_start"() <{level = 10 : i32, message = "bpd,bqd->bpq"}> : () -> ()
    %cst = arith.constant dense<0.000000e+00> : vector<1x128x128xf32>
    %1 = tpu.matmul %0, %0, %cst {dimension_numbers = #tpu.dot_dimension_numbers<[2], [2], [1], [1], [0, 0, 0, 1, 1, 1], [0], [0]>} : vector<1x128x128xbf16>, vector<1x128x128xbf16>, vector<1x128x128xf32> -> vector<1x128x128xf32>
    "tpu.trace_stop"() : () -> ()
    %2 = tpu.iota {dimensions = array<i32: 1>} : vector<1x128xi32>
    %c16_i32 = arith.constant 16 : i32
    %3 = vector.broadcast %c16_i32 : i32 to vector<1x128xi32>
    %4 = arith.cmpi slt, %2, %3 : vector<1x128xi32>
    %c0_2 = arith.constant 0 : index
    %c0_3 = arith.constant 0 : index
    %5 = vector.load %arg3[%c0_2, %c0_3] : memref<128x1xi32, #tpu.memory_space<vmem>>, vector<128x1xi32>
    %c0_4 = arith.constant 0 : index
    %c0_5 = arith.constant 0 : index
    %6 = vector.load %arg2[%c0_4, %c0_5] : memref<1x128xi32, #tpu.memory_space<vmem>>, vector<1x128xi32>
    %7 = vector.broadcast %5 : vector<128x1xi32> to vector<128x128xi32>
    %8 = vector.broadcast %6 : vector<1x128xi32> to vector<128x128xi32>
    %9 = arith.cmpi ne, %7, %8 : vector<128x128xi32>
    %10 = vector.broadcast %4 : vector<1x128xi1> to vector<128x128xi1>
    %11 = arith.andi %9, %10 : vector<128x128xi1>
    %12 = vector.shape_cast %11 : vector<128x128xi1> to vector<1x128x128xi1>
    %cst_6 = arith.constant 0xFF800000 : f32
    %13 = vector.broadcast %cst_6 : f32 to vector<1x128x128xf32>
    %14 = arith.select %12, %1, %13 : vector<1x128x128xi1>, vector<1x128x128xf32>
    %cst_7 = arith.constant dense<0xFF800000> : vector<1x128xf32>
    %15 = vector.multi_reduction <maximumf>, %14, %cst_7 [2] : vector<1x128x128xf32> to vector<1x128xf32>
    %16 = vector.shape_cast %15 : vector<1x128xf32> to vector<1x128x1xf32>
    %17 = tpu.iota {dimensions = array<i32: 2>} : vector<1x1x128xi32>
    %18 = vector.broadcast %16 : vector<1x128x1xf32> to vector<1x128x128xf32>
    %19 = arith.cmpf oeq, %14, %18 : vector<1x128x128xf32>
    %c128_i32 = arith.constant 128 : i32
    %20 = vector.shape_cast %17 : vector<1x1x128xi32> to vector<1x1x128xi32>
    %21 = vector.broadcast %20 : vector<1x1x128xi32> to vector<1x128x128xi32>
    %22 = vector.broadcast %c128_i32 : i32 to vector<1x128x128xi32>
    %23 = arith.select %19, %21, %22 : vector<1x128x128xi1>, vector<1x128x128xi32>
    %cst_8 = arith.constant dense<2147483647> : vector<1x128xi32>
    %24 = vector.multi_reduction <minsi>, %23, %cst_8 [2] : vector<1x128x128xi32> to vector<1x128xi32>
    %25 = vector.shape_cast %16 : vector<1x128x1xf32> to vector<1x128xf32>
    %cst_9 = arith.constant -1.000000e+00 : f32
    %26 = vector.broadcast %cst_9 : f32 to vector<1x128xf32>
    %27 = arith.maximumf %25, %26 : vector<1x128xf32>
    %28 = vector.shape_cast %27 : vector<1x128xf32> to vector<1x1x128xf32>
    %c0_10 = arith.constant 0 : index
    %c0_11 = arith.constant 0 : index
    %c0_12 = arith.constant 0 : index
    %29 = vector.load %arg4[%c0_10, %c0_11, %c0_12] : memref<1x1x128xf32, #tpu.memory_space<vmem>>, vector<1x1x128xf32>
    tpu.vector_store %arg4[%c0_10, %c0_11, %c0_12], %28 {strides = array<i32>} : memref<1x1x128xf32, #tpu.memory_space<vmem>>, vector<1x1x128xf32>,
    %30 = vector.shape_cast %24 : vector<1x128xi32> to vector<1x1x128xi32>
    %c0_13 = arith.constant 0 : index
    %c0_14 = arith.constant 0 : index
    %c0_15 = arith.constant 0 : index
    %31 = vector.load %arg5[%c0_13, %c0_14, %c0_15] : memref<1x1x128xi32, #tpu.memory_space<vmem>>, vector<1x1x128xi32>
    tpu.vector_store %arg5[%c0_13, %c0_14, %c0_15], %30 {strides = array<i32>} : memref<1x1x128xi32, #tpu.memory_space<vmem>>, vector<1x1x128xi32>,
    return
  }
  func.func @transform_0(%arg0: i32) -> (i32, i32, i32) {
    %c0_i32 = arith.constant 0 : i32
    %c0_i32_0 = arith.constant 0 : i32
    %c0_i32_1 = arith.constant 0 : i32
    return %arg0, %c0_i32, %c0_i32_0 : i32, i32, i32
  }
  func.func @transform_1(%arg0: i32) -> (i32, i32) {
    %c0_i32 = arith.constant 0 : i32
    %c0_i32_0 = arith.constant 0 : i32
    %c0_i32_1 = arith.constant 0 : i32
    return %c0_i32, %c0_i32_0 : i32, i32
  }
  func.func @transform_2(%arg0: i32) -> (i32, i32) {
    %c0_i32 = arith.constant 0 : i32
    %c0_i32_0 = arith.constant 0 : i32
    %c0_i32_1 = arith.constant 0 : i32
    return %c0_i32, %c0_i32_0 : i32, i32
  }
  func.func @transform_3(%arg0: i32) -> (i32, i32, i32) {
    %c0_i32 = arith.constant 0 : i32
    %c0_i32_0 = arith.constant 0 : i32
    %c0_i32_1 = arith.constant 0 : i32
    return %arg0, %c0_i32, %c0_i32_0 : i32, i32, i32
  }
  func.func @transform_4(%arg0: i32) -> (i32, i32, i32) {
    %c0_i32 = arith.constant 0 : i32
    %c0_i32_0 = arith.constant 0 : i32
    %c0_i32_1 = arith.constant 0 : i32
    return %arg0, %c0_i32, %c0_i32_0 : i32, i32, i32
  }
}

</mosaic_0001>

<llo_original>
// kernel: feature_match_simple_loss.1
$region0: #{feature_match_simple_loss.1}
  #allocation0 [shape = 'u32[]', space=smem, size = 0x4, offset = 0x4, fixed_abs, tag = 'smem constant byte address 0x4 - core index']
  #allocation1 [shape = 'u32[144,128]{1,0:T(1,128)}', space=vmem, size = 0x12000, scoped, tag = 'internal scratch']
  %s0 = inlined_call_operand.vmem [shape: bf16[2,128,128], index: 0, kind: input, shape index: {}]
  %s1 = inlined_call_operand.vmem [shape: s32[1,128], index: 1, kind: input, shape index: {}]
  %s2 = inlined_call_operand.vmem [shape: s32[128,1], index: 2, kind: input, shape index: {}]
  %s3 = inlined_call_operand.vmem [shape: f32[2,1,128], index: 3, kind: output, shape index: {0}]
  %s4 = inlined_call_operand.vmem [shape: s32[2,1,128], index: 4, kind: output, shape index: {1}]
  %5 = xla_tuple %s3, %s4
  %s6 = sld [smem:[#allocation0]]
  $region53: #{feature_match_simple_loss.1} parent=0
    _
  %s8 = ssub.s32 1, %s6
  %s9 = scalar_select 0, %s8, %s6
  loop: start=0, step=1, limit=4
  $region2: #{feature_match_simple_loss.1} parent=0 // loop_pre_header
    _
  $region3: #{feature_match_simple_loss.1} parent=0 // loop_header
    %s11 = sphi 0, %s15
    %p12 = scmp.ge.s32.totalorder %s11, 4
    %s21 = sphi 0, %s23
    %s24 = sphi 0, %s21
    %s25 = sphi 0, %s24
    %s41 = sphi 0, %s25
    %s45 = sphi 0, %s45
    %s47 = sphi 0, %s45
    %s48 = sphi 0, %s47
    %s62 = sphi 0, %s48
    %s66 = sphi 0, %s66
    %s68 = sphi 0, %s66
    %s69 = sphi 0, %s68
    %s83 = sphi 0, %s69
    %s89 = sphi 0, %s91
    %s92 = sphi 0, %s89
    %s93 = sphi 0, %s92
    %s109 = sphi 0, %s93
    %s115 = sphi 0, %s117
    %s118 = sphi 0, %s115
    %s119 = sphi 0, %s118
    %s135 = sphi 0, %s119
  $region4: #{feature_match_simple_loss.1} parent=0 // loop_header_branch
    %14 = sbr.rel (%p12) target = $region8
  $region5: #{feature_match_simple_loss.1} parent=0 // loop_body
    %s16 = ssub.s32 %s11, 1
    %s17 = ssub.s32 %s11, 2
    %s18 = sadd.s32 %s11, 1
    %s19 = ssub.s32 %s11, %s18
    %p20 = scmp.eq.s32.totalorder %s19, 0
    %s22 = sadd.s32 %s21, 1
    %s23 = scalar_select %p20, %s21, %s22
    %p26 = pneg %p20
    %p27 = scmp.eq.s32.totalorder %s11, 1
    %p28 = por %p26, %p27
    %p29 = scmp.ne.s32.totalorder %s21, %s24
    %p30 = scmp.eq.s32.totalorder %s11, 0
    %p31 = por %p29, %p30
    %p32 = scmp.ne.s32.totalorder %s21, %s24
    %p33 = scmp.eq.s32.totalorder %s16, 1
    %p34 = por %p32, %p33
    %p35 = scmp.ne.s32.totalorder %s24, %s25
    %p36 = scmp.eq.s32.totalorder %s16, 0
    %p37 = por %p35, %p36
    %p38 = scmp.ne.s32.totalorder %s24, %s25
    %p39 = scmp.eq.s32.totalorder %s17, 1
    %p40 = por %p38, %p39
    %p42 = scmp.ne.s32.totalorder %s25, %s41
    %p43 = scmp.eq.s32.totalorder %s17, 0
    %p44 = por %p42, %p43
    %s46 = sadd.s32 %s45, 1
    %p49 = scmp.eq.s32.totalorder %s11, 1
    %p50 = scmp.ne.s32.totalorder %s45, %s47
    %p51 = scmp.eq.s32.totalorder %s11, 0
    %p52 = por %p50, %p51
    %p53 = scmp.ne.s32.totalorder %s45, %s47
    %p54 = scmp.eq.s32.totalorder %s16, 1
    %p55 = por %p53, %p54
    %p56 = scmp.ne.s32.totalorder %s47, %s48
    %p57 = scmp.eq.s32.totalorder %s16, 0
    %p58 = por %p56, %p57
    %p59 = scmp.ne.s32.totalorder %s47, %s48
    %p60 = scmp.eq.s32.totalorder %s17, 1
    %p61 = por %p59, %p60
    %p63 = scmp.ne.s32.totalorder %s48, %s62
    %p64 = scmp.eq.s32.totalorder %s17, 0
    %p65 = por %p63, %p64
    %s67 = sadd.s32 %s66, 1
    %p70 = scmp.eq.s32.totalorder %s11, 1
    %p71 = scmp.ne.s32.totalorder %s66, %s68
    %p72 = scmp.eq.s32.totalorder %s11, 0
    %p73 = por %p71, %p72
    %p74 = scmp.ne.s32.totalorder %s66, %s68
    %p75 = scmp.eq.s32.totalorder %s16, 1
    %p76 = por %p74, %p75
    %p77 = scmp.ne.s32.totalorder %s68, %s69
    %p78 = scmp.eq.s32.totalorder %s16, 0
    %p79 = por %p77, %p78
    %p80 = scmp.ne.s32.totalorder %s68, %s69
    %p81 = scmp.eq.s32.totalorder %s17, 1
    %p82 = por %p80, %p81
    %p84 = scmp.ne.s32.totalorder %s69, %s83
    %p85 = scmp.eq.s32.totalorder %s17, 0
    %p86 = por %p84, %p85
    %s87 = ssub.s32 %s11, %s18
    %p88 = scmp.eq.s32.totalorder %s87, 0
    %s90 = sadd.s32 %s89, 1
    %s91 = scalar_select %p88, %s89, %s90
    %p94 = pneg %p88
    %p95 = scmp.eq.s32.totalorder %s11, 1
    %p96 = por %p94, %p95
    %p97 = scmp.ne.s32.totalorder %s89, %s92
    %p98 = scmp.eq.s32.totalorder %s11, 0
    %p99 = por %p97, %p98
    %p100 = scmp.ne.s32.totalorder %s89, %s92
    %p101 = scmp.eq.s32.totalorder %s16, 1
    %p102 = por %p100, %p101
    %p103 = scmp.ne.s32.totalorder %s92, %s93
    %p104 = scmp.eq.s32.totalorder %s16, 0
    %p105 = por %p103, %p104
    %p106 = scmp.ne.s32.totalorder %s92, %s93
    %p107 = scmp.eq.s32.totalorder %s17, 1
    %p108 = por %p106, %p107
    %p110 = scmp.ne.s32.totalorder %s93, %s109
    %p111 = scmp.eq.s32.totalorder %s17, 0
    %p112 = por %p110, %p111
    %s113 = ssub.s32 %s11, %s18
    %p114 = scmp.eq.s32.totalorder %s113, 0
    %s116 = sadd.s32 %s115, 1
    %s117 = scalar_select %p114, %s115, %s116
    %p120 = pneg %p114
    %p121 = scmp.eq.s32.totalorder %s11, 1
    %p122 = por %p120, %p121
    %p123 = scmp.ne.s32.totalorder %s115, %s118
    %p124 = scmp.eq.s32.totalorder %s11, 0
    %p125 = por %p123, %p124
    %p126 = scmp.ne.s32.totalorder %s115, %s118
    %p127 = scmp.eq.s32.totalorder %s16, 1
    %p128 = por %p126, %p127
    %p129 = scmp.ne.s32.totalorder %s118, %s119
    %p130 = scmp.eq.s32.totalorder %s16, 0
    %p131 = por %p129, %p130
    %p132 = scmp.ne.s32.totalorder %s118, %s119
    %p133 = scmp.eq.s32.totalorder %s17, 1
    %p134 = por %p132, %p133
    %p136 = scmp.ne.s32.totalorder %s119, %s135
    %p137 = scmp.eq.s32.totalorder %s17, 0
    %p138 = por %p136, %p137
    %p139 = scmp.le.s32.totalorder 1, %s11
    %p140 = scmp.lt.s32.totalorder %s11, 3
    %p141 = pnand %p139, %p140
    %p142 = pneg %p141
    // Predicated region
    $region9: #{feature_match_simple_loss.1} parent=5 // pred_check
      _
    $region10: #{feature_match_simple_loss.1} parent=5 // pred_check_branch
      %144 = sbr.rel (%p141) target = $region12
    $region11: #{feature_match_simple_loss.1} parent=5 // pred_region
      %s145 = ssub.s32 %s11, 1
      // Predicated region
      $region13: #{feature_match_simple_loss.1} parent=11 // pred_check
        %p146 = pneg %p58
      $region14: #{feature_match_simple_loss.1} parent=11 // pred_check_branch
        %148 = sbr.rel (%p146) target = $region16
      $region15: #{feature_match_simple_loss.1} parent=11 // pred_region
        _
      $region16: #{feature_match_simple_loss.1} parent=11 // pred_fallthru
        _
      // Predicated region
      $region17: #{feature_match_simple_loss.1} parent=11 // pred_check
        %p149 = pneg %p79
      $region18: #{feature_match_simple_loss.1} parent=11 // pred_check_branch
        %151 = sbr.rel (%p149) target = $region20
      $region19: #{feature_match_simple_loss.1} parent=11 // pred_region
        _
      $region20: #{feature_match_simple_loss.1} parent=11 // pred_fallthru
        _
    $region12: #{feature_match_simple_loss.1} parent=5 // pred_fallthru
      _
    %p152 = scmp.lt.s32.totalorder %s11, 2
    // Predicated region
    $region21: #{feature_match_simple_loss.1} parent=5 // pred_check
      %p153 = pneg %p152
    $region22: #{feature_match_simple_loss.1} parent=5 // pred_check_branch
      %155 = sbr.rel (%p153) target = $region24
    $region23: #{feature_match_simple_loss.1} parent=5 // pred_region
      // Predicated region
      $region25: #{feature_match_simple_loss.1} parent=23 // pred_check
        %p156 = pneg %p31
      $region26: #{feature_match_simple_loss.1} parent=23 // pred_check_branch
        %158 = sbr.rel (%p156) target = $region28
      $region27: #{feature_match_simple_loss.1} parent=23 // pred_region
        %p159 = scmp.lt.s32.totalorder %s11, 1
        %s160 = scalar_select %p159, %s11, 1
        %s161 = smul.addr %s160, 16
        %s162 = smul.addr %s161, 4
        %s163 = scalar_lea.vmem %s0, %s162
      $region28: #{feature_match_simple_loss.1} parent=23 // pred_fallthru
        _
    $region24: #{feature_match_simple_loss.1} parent=5 // pred_fallthru
      _
    %p164 = scmp.le.s32.totalorder 1, %s11
    %p165 = scmp.lt.s32.totalorder %s11, 3
    %p166 = pnand %p164, %p165
    %p167 = pneg %p166
    // Predicated region
    $region29: #{feature_match_simple_loss.1} parent=5 // pred_check
      _
    $region30: #{feature_match_simple_loss.1} parent=5 // pred_check_branch
      %169 = sbr.rel (%p166) target = $region32
    $region31: #{feature_match_simple_loss.1} parent=5 // pred_region
      %s170 = ssub.s32 %s11, 1
      %p171 = scmp.lt.s32.totalorder %s16, 1
      %s172 = scalar_select %p171, %s16, 1
      %s173 = smul.addr %s172, 16
      %s174 = smul.addr %s173, 4
      %s175 = scalar_lea.vmem %s0, %s174
      %p176 = pneg %p37
      %p177 = pneg %p34
      %p178 = pneg %p58
      %p179 = pneg %p55
      %p180 = pneg %p79
      %p181 = pneg %p76
      %p182 = pneg %p105
      %p183 = pneg %p102
      %p184 = scmp.lt.s32.totalorder %s16, 1
      %s185 = scalar_select %p184, %s16, 1
      %s186 = scalar_lea.vmem %s3, %s185
      %p187 = pneg %p131
      %p188 = pneg %p128
      %p189 = scmp.lt.s32.totalorder %s16, 1
      %s190 = scalar_select %p189, %s16, 1
      %s191 = scalar_lea.vmem %s4, %s190
      %p192 = scmp.lt.s32.totalorder %s16, 1
      %s193 = scalar_select %p192, %s16, 1
      %s194 = smul.addr %s193, 16
      %s195 = smul.addr %s194, 4
      %s196 = scalar_lea.vmem %s0, %s195
      %p197 = scmp.lt.s32.totalorder %s16, 1
      %s198 = scalar_select %p197, %s16, 1
      %s199 = scalar_lea.vmem %s3, %s198
      %p200 = scmp.lt.s32.totalorder %s16, 1
      %s201 = scalar_select %p200, %s16, 1
      %s202 = scalar_lea.vmem %s4, %s201
      %v204 = vld [vmem:[%s196] sm:$0xf]
      %v205 = vld [vmem:[%s196 + $0x4] sm:$0xf]
      %v206 = vld [vmem:[%s196 + $0x8] sm:$0xf]
      %v207 = vld [vmem:[%s196 + $0xc] sm:$0xf]
      %v208 = vld [vmem:[%s196 + $0x10] sm:$0xf]
      %v209 = vld [vmem:[%s196 + $0x14] sm:$0xf]
      %v210 = vld [vmem:[%s196 + $0x18] sm:$0xf]
      %v211 = vld [vmem:[%s196 + $0x1c] sm:$0xf]
      %v212 = vld [vmem:[%s196 + $0x20] sm:$0xf]
      %v213 = vld [vmem:[%s196 + $0x24] sm:$0xf]
      %v214 = vld [vmem:[%s196 + $0x28] sm:$0xf]
      %v215 = vld [vmem:[%s196 + $0x2c] sm:$0xf]
      %v216 = vld [vmem:[%s196 + $0x30] sm:$0xf]
      %v217 = vld [vmem:[%s196 + $0x34] sm:$0xf]
      %v218 = vld [vmem:[%s196 + $0x38] sm:$0xf]
      %v219 = vld [vmem:[%s196 + $0x3c] sm:$0xf]
      %v236 = vunpack.c.l.b16 %v204
      %v237 = vunpack.c.l.b16 %v205
      %v238 = vunpack.c.l.b16 %v206
      %v239 = vunpack.c.l.b16 %v207
      %v240 = vunpack.c.l.b16 %v208
      %v241 = vunpack.c.l.b16 %v209
      %v242 = vunpack.c.l.b16 %v210
      %v243 = vunpack.c.l.b16 %v211
      %v244 = vunpack.c.l.b16 %v212
      %v245 = vunpack.c.l.b16 %v213
      %v246 = vunpack.c.l.b16 %v214
      %v247 = vunpack.c.l.b16 %v215
      %v248 = vunpack.c.l.b16 %v216
      %v249 = vunpack.c.l.b16 %v217
      %v250 = vunpack.c.l.b16 %v218
      %v251 = vunpack.c.l.b16 %v219
      %v252 = vpack.c.b16 %v237, %v236
      %v253 = vpack.c.b16 %v239, %v238
      %v254 = vpack.c.b16 %v241, %v240
      %v255 = vpack.c.b16 %v243, %v242
      %v256 = vpack.c.b16 %v245, %v244
      %v257 = vpack.c.b16 %v247, %v246
      %v258 = vpack.c.b16 %v249, %v248
      %v259 = vpack.c.b16 %v251, %v250
      %268 = vmatprep.subr.bf16.mxu0 0
      %269 = vmatpush1.bf16.xpose.msra.mxu0 %v259
      %270 = vmatprep.subr.bf16.mxu0 0
      %271 = vmatpush1.bf16.xpose.msra.mxu0 %v258
      %272 = vmatprep.subr.bf16.mxu0 0
      %273 = vmatpush1.bf16.xpose.msra.mxu0 %v257
      %274 = vmatprep.subr.bf16.mxu0 0
      %275 = vmatpush1.bf16.xpose.msra.mxu0 %v256
      %276 = vmatprep.subr.bf16.mxu0 0
      %277 = vmatpush1.bf16.xpose.msra.mxu0 %v255
      %278 = vmatprep.subr.bf16.mxu0 0
      %279 = vmatpush1.bf16.xpose.msra.mxu0 %v254
      %280 = vmatprep.subr.bf16.mxu0 0
      %281 = vmatpush1.bf16.xpose.msra.mxu0 %v253
      %282 = vmatprep.subr.bf16.mxu0 0
      %283 = vmatpush1.bf16.xpose.msra.mxu0 %v252
      %284 = vmatprep.subr.bf16.mxu0 0
      %285 = vmatpush2.bf16.xpose.msra.mxu0 0
      %286 = vmatprep.subr.bf16.mxu0 0
      %287 = vmatpush2.bf16.xpose.msra.mxu0 0
      %288 = vmatprep.subr.bf16.mxu0 0
      %289 = vmatpush2.bf16.xpose.msra.mxu0 0
      %290 = vmatprep.subr.bf16.mxu0 0
      %291 = vmatpush2.bf16.xpose.msra.mxu0 0
      %292 = vmatprep.subr.bf16.mxu0 0
      %293 = vmatpush2.bf16.xpose.msra.mxu0 0
      %294 = vmatprep.subr.bf16.mxu0 0
      %295 = vmatpush2.bf16.xpose.msra.mxu0 0
      %296 = vmatprep.subr.bf16.mxu0 0
      %297 = vmatpush2.bf16.xpose.msra.mxu0 0
      %298 = vmatprep.subr.bf16.mxu0 0
      %299 = vmatpush2.bf16.xpose.msra.mxu0 0
      %300 = vmatprep.mubr.bf16.mxu0 0
      %301 = vmatmul.mubr.bf16.gmra.mxu0 %v252
      %v302 = vpop.f32.mrf.mxu0
      %v303 = vadd.f32 0.0, %v302
      %v304 = vpop.f32.mrf.mxu0
      %v305 = vpop.f32.mrf.mxu0
      %v306 = vadd.f32 0.0, %v305
      %v307 = vpop.f32.mrf.mxu0
      %308 = vmatprep.mubr.bf16.mxu0 0
      %309 = vmatmul.mubr.bf16.gmra.mxu0 %v253
      %v310 = vpop.f32.mrf.mxu0
      %v311 = vadd.f32 0.0, %v310
      %v312 = vpop.f32.mrf.mxu0
      %v313 = vpop.f32.mrf.mxu0
      %v314 = vadd.f32 0.0, %v313
      %v315 = vpop.f32.mrf.mxu0
      %316 = vmatprep.mubr.bf16.mxu0 0
      %317 = vmatmul.mubr.bf16.gmra.mxu0 %v254
      %v318 = vpop.f32.mrf.mxu0
      %v319 = vadd.f32 0.0, %v318
      %v320 = vpop.f32.mrf.mxu0
      %v321 = vpop.f32.mrf.mxu0
      %v322 = vadd.f32 0.0, %v321
      %v323 = vpop.f32.mrf.mxu0
      %324 = vmatprep.mubr.bf16.mxu0 0
      %325 = vmatmul.mubr.bf16.gmra.mxu0 %v255
      %v326 = vpop.f32.mrf.mxu0
      %v327 = vadd.f32 0.0, %v326
      %v328 = vpop.f32.mrf.mxu0
      %v329 = vpop.f32.mrf.mxu0
      %v330 = vadd.f32 0.0, %v329
      %v331 = vpop.f32.mrf.mxu0
      %332 = vmatprep.mubr.bf16.mxu0 0
      %333 = vmatmul.mubr.bf16.gmra.mxu0 %v256
      %v334 = vpop.f32.mrf.mxu0
      %v335 = vadd.f32 0.0, %v334
      %v336 = vpop.f32.mrf.mxu0
      %v337 = vpop.f32.mrf.mxu0
      %v338 = vadd.f32 0.0, %v337
      %v339 = vpop.f32.mrf.mxu0
      %340 = vmatprep.mubr.bf16.mxu0 0
      %341 = vmatmul.mubr.bf16.gmra.mxu0 %v257
      %v342 = vpop.f32.mrf.mxu0
      %v343 = vadd.f32 0.0, %v342
      %v344 = vpop.f32.mrf.mxu0
      %v345 = vpop.f32.mrf.mxu0
      %v346 = vadd.f32 0.0, %v345
      %v347 = vpop.f32.mrf.mxu0
      %348 = vmatprep.mubr.bf16.mxu0 0
      %349 = vmatmul.mubr.bf16.gmra.mxu0 %v258
      %v350 = vpop.f32.mrf.mxu0
      %v351 = vadd.f32 0.0, %v350
      %v352 = vpop.f32.mrf.mxu0
      %v353 = vpop.f32.mrf.mxu0
      %v354 = vadd.f32 0.0, %v353
      %v355 = vpop.f32.mrf.mxu0
      %356 = vmatprep.mubr.bf16.mxu0 0
      %357 = vmatmul.mubr.bf16.gmra.mxu0 %v259
      %v358 = vpop.f32.mrf.mxu0
      %v359 = vadd.f32 0.0, %v358
      %v360 = vpop.f32.mrf.mxu0
      %v361 = vpop.f32.mrf.mxu0
      %v362 = vadd.f32 0.0, %v361
      %v363 = vpop.f32.mrf.mxu0
      %364 = vdwg.mxu0
      %v365 = vlaneseq
      %v366 = vand.u32 %v365, 127
      %vm367 = vcmp.lt.s32.totalorder %v366, 16
      %v368 = vld [vmem:[%s2] sm:$0xff]
      %v369 = vld [vmem:[%s2 + $0x8] sm:$0xff]
      %v370 = vld [vmem:[%s2 + $0x10] sm:$0xff]
      %v371 = vld [vmem:[%s2 + $0x18] sm:$0xff]
      %v372 = vld [vmem:[%s2 + $0x20] sm:$0xff]
      %v373 = vld [vmem:[%s2 + $0x28] sm:$0xff]
      %v374 = vld [vmem:[%s2 + $0x30] sm:$0xff]
      %v375 = vld [vmem:[%s2 + $0x38] sm:$0xff]
      %v376 = vld [vmem:[%s2 + $0x40] sm:$0xff]
      %v377 = vld [vmem:[%s2 + $0x48] sm:$0xff]
      %v378 = vld [vmem:[%s2 + $0x50] sm:$0xff]
      %v379 = vld [vmem:[%s2 + $0x58] sm:$0xff]
      %v380 = vld [vmem:[%s2 + $0x60] sm:$0xff]
      %v381 = vld [vmem:[%s2 + $0x68] sm:$0xff]
      %v382 = vld [vmem:[%s2 + $0x70] sm:$0xff]
      %v383 = vld [vmem:[%s2 + $0x78] sm:$0xff]
      %v384 = vld [vmem:[%s1] sm:$0x1]
      %385 = vset.pattern.permute.xlu0 0
      %386 = vperm.xlu0 %385, %v368
      %v387 = vpop.permute.xlu0 %386
      %388 = vset.pattern.permute.xlu0 0
      %389 = vperm.xlu0 %388, %v369
      %v390 = vpop.permute.xlu0 %389
      %391 = vset.pattern.permute.xlu0 0
      %392 = vperm.xlu0 %391, %v370
      %v393 = vpop.permute.xlu0 %392
      %394 = vset.pattern.permute.xlu0 0
      %395 = vperm.xlu0 %394, %v371
      %v396 = vpop.permute.xlu0 %395
      %397 = vset.pattern.permute.xlu0 0
      %398 = vperm.xlu0 %397, %v372
      %v399 = vpop.permute.xlu0 %398
      %400 = vset.pattern.permute.xlu0 0
      %401 = vperm.xlu0 %400, %v373
      %v402 = vpop.permute.xlu0 %401
      %403 = vset.pattern.permute.xlu0 0
      %404 = vperm.xlu0 %403, %v374
      %v405 = vpop.permute.xlu0 %404
      %406 = vset.pattern.permute.xlu0 0
      %407 = vperm.xlu0 %406, %v375
      %v408 = vpop.permute.xlu0 %407
      %409 = vset.pattern.permute.xlu0 0
      %410 = vperm.xlu0 %409, %v376
      %v411 = vpop.permute.xlu0 %410
      %412 = vset.pattern.permute.xlu0 0
      %413 = vperm.xlu0 %412, %v377
      %v414 = vpop.permute.xlu0 %413
      %415 = vset.pattern.permute.xlu0 0
      %416 = vperm.xlu0 %415, %v378
      %v417 = vpop.permute.xlu0 %416
      %418 = vset.pattern.permute.xlu0 0
      %419 = vperm.xlu0 %418, %v379
      %v420 = vpop.permute.xlu0 %419
      %421 = vset.pattern.permute.xlu0 0
      %422 = vperm.xlu0 %421, %v380
      %v423 = vpop.permute.xlu0 %422
      %424 = vset.pattern.permute.xlu0 0
      %425 = vperm.xlu0 %424, %v381
      %v426 = vpop.permute.xlu0 %425
      %427 = vset.pattern.permute.xlu0 0
      %428 = vperm.xlu0 %427, %v382
      %v429 = vpop.permute.xlu0 %428
      %430 = vset.pattern.permute.xlu0 0
      %431 = vperm.xlu0 %430, %v383
      %v432 = vpop.permute.xlu0 %431
      %v433 = vlaneseq
      %v434 = vshrl.u32 %v433, 7
      %v435 = vsub.s32 0, %v434
      %v436 = vrot.slane %v384, %v435
      %vm437 = vcmp.ne.s32.totalorder %v387, %v436
      %vm438 = vcmp.ne.s32.totalorder %v390, %v436
      %vm439 = vcmp.ne.s32.totalorder %v393, %v436
      %vm440 = vcmp.ne.s32.totalorder %v396, %v436
      %vm441 = vcmp.ne.s32.totalorder %v399, %v436
      %vm442 = vcmp.ne.s32.totalorder %v402, %v436
      %vm443 = vcmp.ne.s32.totalorder %v405, %v436
      %vm444 = vcmp.ne.s32.totalorder %v408, %v436
      %vm445 = vcmp.ne.s32.totalorder %v411, %v436
      %vm446 = vcmp.ne.s32.totalorder %v414, %v436
      %vm447 = vcmp.ne.s32.totalorder %v417, %v436
      %vm448 = vcmp.ne.s32.totalorder %v420, %v436
      %vm449 = vcmp.ne.s32.totalorder %v423, %v436
      %vm450 = vcmp.ne.s32.totalorder %v426, %v436
      %vm451 = vcmp.ne.s32.totalorder %v429, %v436
      %vm452 = vcmp.ne.s32.totalorder %v432, %v436
      %v453 = vsel %vm367, 1, 0
      %vm454 = vcmp.eq.s32.totalorder %v453, 1
      %vm455 = vmand %vm437, %vm454
      %vm456 = vmand %vm438, %vm454
      %vm457 = vmand %vm439, %vm454
      %vm458 = vmand %vm440, %vm454
      %vm459 = vmand %vm441, %vm454
      %vm460 = vmand %vm442, %vm454
      %vm461 = vmand %vm443, %vm454
      %vm462 = vmand %vm444, %vm454
      %vm463 = vmand %vm445, %vm454
      %vm464 = vmand %vm446, %vm454
      %vm465 = vmand %vm447, %vm454
      %vm466 = vmand %vm448, %vm454
      %vm467 = vmand %vm449, %vm454
      %vm468 = vmand %vm450, %vm454
      %vm469 = vmand %vm451, %vm454
      %vm470 = vmand %vm452, %vm454
      %v471 = vsel %vm455, %v303, -inf
      %v472 = vsel %vm456, %v306, -inf
      %v473 = vsel %vm457, %v311, -inf
      %v474 = vsel %vm458, %v314, -inf
      %v475 = vsel %vm459, %v319, -inf
      %v476 = vsel %vm460, %v322, -inf
      %v477 = vsel %vm461, %v327, -inf
      %v478 = vsel %vm462, %v330, -inf
      %v479 = vsel %vm463, %v335, -inf
      %v480 = vsel %vm464, %v338, -inf
      %v481 = vsel %vm465, %v343, -inf
      %v482 = vsel %vm466, %v346, -inf
      %v483 = vsel %vm467, %v351, -inf
      %v484 = vsel %vm468, %v354, -inf
      %v485 = vsel %vm469, %v359, -inf
      %v486 = vsel %vm470, %v362, -inf
      %487 = vmax.xlane.f32.xlu0 %v471
      %v488 = vpop.xlane.xlu0 %487
      %489 = vmax.xlane.f32.xlu0 %v472
      %v490 = vpop.xlane.xlu0 %489
      %491 = vmax.xlane.f32.xlu0 %v473
      %v492 = vpop.xlane.xlu0 %491
      %493 = vmax.xlane.f32.xlu0 %v474
      %v494 = vpop.xlane.xlu0 %493
      %495 = vmax.xlane.f32.xlu0 %v475
      %v496 = vpop.xlane.xlu0 %495
      %497 = vmax.xlane.f32.xlu0 %v476
      %v498 = vpop.xlane.xlu0 %497
      %499 = vmax.xlane.f32.xlu0 %v477
      %v500 = vpop.xlane.xlu0 %499
      %501 = vmax.xlane.f32.xlu0 %v478
      %v502 = vpop.xlane.xlu0 %501
      %503 = vmax.xlane.f32.xlu0 %v479
      %v504 = vpop.xlane.xlu0 %503
      %505 = vmax.xlane.f32.xlu0 %v480
      %v506 = vpop.xlane.xlu0 %505
      %507 = vmax.xlane.f32.xlu0 %v481
      %v508 = vpop.xlane.xlu0 %507
      %509 = vmax.xlane.f32.xlu0 %v482
      %v510 = vpop.xlane.xlu0 %509
      %511 = vmax.xlane.f32.xlu0 %v483
      %v512 = vpop.xlane.xlu0 %511
      %513 = vmax.xlane.f32.xlu0 %v484
      %v514 = vpop.xlane.xlu0 %513
      %515 = vmax.xlane.f32.xlu0 %v485
      %v516 = vpop.xlane.xlu0 %515
      %517 = vmax.xlane.f32.xlu0 %v486
      %v518 = vpop.xlane.xlu0 %517
      %vm519 = vcmp.eq.f32.partialorder %v471, %v488
      %vm520 = vcmp.eq.f32.partialorder %v472, %v490
      %vm521 = vcmp.eq.f32.partialorder %v473, %v492
      %vm522 = vcmp.eq.f32.partialorder %v474, %v494
      %vm523 = vcmp.eq.f32.partialorder %v475, %v496
      %vm524 = vcmp.eq.f32.partialorder %v476, %v498
      %vm525 = vcmp.eq.f32.partialorder %v477, %v500
      %vm526 = vcmp.eq.f32.partialorder %v478, %v502
      %vm527 = vcmp.eq.f32.partialorder %v479, %v504
      %vm528 = vcmp.eq.f32.partialorder %v480, %v506
      %vm529 = vcmp.eq.f32.partialorder %v481, %v508
      %vm530 = vcmp.eq.f32.partialorder %v482, %v510
      %vm531 = vcmp.eq.f32.partialorder %v483, %v512
      %vm532 = vcmp.eq.f32.partialorder %v484, %v514
      %vm533 = vcmp.eq.f32.partialorder %v485, %v516
      %vm534 = vcmp.eq.f32.partialorder %v486, %v518
      %v535 = vsel %vm519, %v366, 128
      %v536 = vsel %vm520, %v366, 128
      %v537 = vsel %vm521, %v366, 128
      %v538 = vsel %vm522, %v366, 128
      %v539 = vsel %vm523, %v366, 128
      %v540 = vsel %vm524, %v366, 128
      %v541 = vsel %vm525, %v366, 128
      %v542 = vsel %vm526, %v366, 128
      %v543 = vsel %vm527, %v366, 128
      %v544 = vsel %vm528, %v366, 128
      %v545 = vsel %vm529, %v366, 128
      %v546 = vsel %vm530, %v366, 128
      %v547 = vsel %vm531, %v366, 128
      %v548 = vsel %vm532, %v366, 128
      %v549 = vsel %vm533, %v366, 128
      %v550 = vsel %vm534, %v366, 128
      %v551 = vand.u32 %v535, 65535
      %v552 = vshra.s32 %v535, 16
      %v553 = vcvt.s32.f32 %v551
      %v554 = vcvt.s32.f32 %v552
      %555 = vmin.xlane.f32.xlu0 %v554
      %v556 = vpop.xlane.xlu0 %555
      %vm557 = vcmp.eq.f32.partialorder %v554, %v556
      %v558 = vsel %vm557, %v553, inf
      %559 = vmin.xlane.f32.xlu0 %v558
      %v560 = vpop.xlane.xlu0 %559
      %v561 = vcvt.f32.s32 %v560
      %v562 = vcvt.f32.s32 %v556
      %v563 = vshll.u32 %v562, 16
      %v564 = vadd.s32 %v563, %v561
      %v565 = vand.u32 %v536, 65535
      %v566 = vshra.s32 %v536, 16
      %v567 = vcvt.s32.f32 %v565
      %v568 = vcvt.s32.f32 %v566
      %569 = vmin.xlane.f32.xlu0 %v568
      %v570 = vpop.xlane.xlu0 %569
      %vm571 = vcmp.eq.f32.partialorder %v568, %v570
      %v572 = vsel %vm571, %v567, inf
      %573 = vmin.xlane.f32.xlu0 %v572
      %v574 = vpop.xlane.xlu0 %573
      %v575 = vcvt.f32.s32 %v574
      %v576 = vcvt.f32.s32 %v570
      %v577 = vshll.u32 %v576, 16
      %v578 = vadd.s32 %v577, %v575
      %v579 = vand.u32 %v537, 65535
      %v580 = vshra.s32 %v537, 16
      %v581 = vcvt.s32.f32 %v579
      %v582 = vcvt.s32.f32 %v580
      %583 = vmin.xlane.f32.xlu0 %v582
      %v584 = vpop.xlane.xlu0 %583
      %vm585 = vcmp.eq.f32.partialorder %v582, %v584
      %v586 = vsel %vm585, %v581, inf
      %587 = vmin.xlane.f32.xlu0 %v586
      %v588 = vpop.xlane.xlu0 %587
      %v589 = vcvt.f32.s32 %v588
      %v590 = vcvt.f32.s32 %v584
      %v591 = vshll.u32 %v590, 16
      %v592 = vadd.s32 %v591, %v589
      %v593 = vand.u32 %v538, 65535
      %v594 = vshra.s32 %v538, 16
      %v595 = vcvt.s32.f32 %v593
      %v596 = vcvt.s32.f32 %v594
      %597 = vmin.xlane.f32.xlu0 %v596
      %v598 = vpop.xlane.xlu0 %597
      %vm599 = vcmp.eq.f32.partialorder %v596, %v598
      %v600 = vsel %vm599, %v595, inf
      %601 = vmin.xlane.f32.xlu0 %v600
      %v602 = vpop.xlane.xlu0 %601
      %v603 = vcvt.f32.s32 %v602
      %v604 = vcvt.f32.s32 %v598
      %v605 = vshll.u32 %v604, 16
      %v606 = vadd.s32 %v605, %v603
      %v607 = vand.u32 %v539, 65535
      %v608 = vshra.s32 %v539, 16
      %v609 = vcvt.s32.f32 %v607
      %v610 = vcvt.s32.f32 %v608
      %611 = vmin.xlane.f32.xlu0 %v610
      %v612 = vpop.xlane.xlu0 %611
      %vm613 = vcmp.eq.f32.partialorder %v610, %v612
      %v614 = vsel %vm613, %v609, inf
      %615 = vmin.xlane.f32.xlu0 %v614
      %v616 = vpop.xlane.xlu0 %615
      %v617 = vcvt.f32.s32 %v616
      %v618 = vcvt.f32.s32 %v612
      %v619 = vshll.u32 %v618, 16
      %v620 = vadd.s32 %v619, %v617
      %v621 = vand.u32 %v540, 65535
      %v622 = vshra.s32 %v540, 16
      %v623 = vcvt.s32.f32 %v621
      %v624 = vcvt.s32.f32 %v622
      %625 = vmin.xlane.f32.xlu0 %v624
      %v626 = vpop.xlane.xlu0 %625
      %vm627 = vcmp.eq.f32.partialorder %v624, %v626
      %v628 = vsel %vm627, %v623, inf
      %629 = vmin.xlane.f32.xlu0 %v628
      %v630 = vpop.xlane.xlu0 %629
      %v631 = vcvt.f32.s32 %v630
      %v632 = vcvt.f32.s32 %v626
      %v633 = vshll.u32 %v632, 16
      %v634 = vadd.s32 %v633, %v631
      %v635 = vand.u32 %v541, 65535
      %v636 = vshra.s32 %v541, 16
      %v637 = vcvt.s32.f32 %v635
      %v638 = vcvt.s32.f32 %v636
      %639 = vmin.xlane.f32.xlu0 %v638
      %v640 = vpop.xlane.xlu0 %639
      %vm641 = vcmp.eq.f32.partialorder %v638, %v640
      %v642 = vsel %vm641, %v637, inf
      %643 = vmin.xlane.f32.xlu0 %v642
      %v644 = vpop.xlane.xlu0 %643
      %v645 = vcvt.f32.s32 %v644
      %v646 = vcvt.f32.s32 %v640
      %v647 = vshll.u32 %v646, 16
      %v648 = vadd.s32 %v647, %v645
      %v649 = vand.u32 %v542, 65535
      %v650 = vshra.s32 %v542, 16
      %v651 = vcvt.s32.f32 %v649
      %v652 = vcvt.s32.f32 %v650
      %653 = vmin.xlane.f32.xlu0 %v652
      %v654 = vpop.xlane.xlu0 %653
      %vm655 = vcmp.eq.f32.partialorder %v652, %v654
      %v656 = vsel %vm655, %v651, inf
      %657 = vmin.xlane.f32.xlu0 %v656
      %v658 = vpop.xlane.xlu0 %657
      %v659 = vcvt.f32.s32 %v658
      %v660 = vcvt.f32.s32 %v654
      %v661 = vshll.u32 %v660, 16
      %v662 = vadd.s32 %v661, %v659
      %v663 = vand.u32 %v543, 65535
      %v664 = vshra.s32 %v543, 16
      %v665 = vcvt.s32.f32 %v663
      %v666 = vcvt.s32.f32 %v664
      %667 = vmin.xlane.f32.xlu0 %v666
      %v668 = vpop.xlane.xlu0 %667
      %vm669 = vcmp.eq.f32.partialorder %v666, %v668
      %v670 = vsel %vm669, %v665, inf
      %671 = vmin.xlane.f32.xlu0 %v670
      %v672 = vpop.xlane.xlu0 %671
      %v673 = vcvt.f32.s32 %v672
      %v674 = vcvt.f32.s32 %v668
      %v675 = vshll.u32 %v674, 16
      %v676 = vadd.s32 %v675, %v673
      %v677 = vand.u32 %v544, 65535
      %v678 = vshra.s32 %v544, 16
      %v679 = vcvt.s32.f32 %v677
      %v680 = vcvt.s32.f32 %v678
      %681 = vmin.xlane.f32.xlu0 %v680
      %v682 = vpop.xlane.xlu0 %681
      %vm683 = vcmp.eq.f32.partialorder %v680, %v682
      %v684 = vsel %vm683, %v679, inf
      %685 = vmin.xlane.f32.xlu0 %v684
      %v686 = vpop.xlane.xlu0 %685
      %v687 = vcvt.f32.s32 %v686
      %v688 = vcvt.f32.s32 %v682
      %v689 = vshll.u32 %v688, 16
      %v690 = vadd.s32 %v689, %v687
      %v691 = vand.u32 %v545, 65535
      %v692 = vshra.s32 %v545, 16
      %v693 = vcvt.s32.f32 %v691
      %v694 = vcvt.s32.f32 %v692
      %695 = vmin.xlane.f32.xlu0 %v694
      %v696 = vpop.xlane.xlu0 %695
      %vm697 = vcmp.eq.f32.partialorder %v694, %v696
      %v698 = vsel %vm697, %v693, inf
      %699 = vmin.xlane.f32.xlu0 %v698
      %v700 = vpop.xlane.xlu0 %699
      %v701 = vcvt.f32.s32 %v700
      %v702 = vcvt.f32.s32 %v696
      %v703 = vshll.u32 %v702, 16
      %v704 = vadd.s32 %v703, %v701
      %v705 = vand.u32 %v546, 65535
      %v706 = vshra.s32 %v546, 16
      %v707 = vcvt.s32.f32 %v705
      %v708 = vcvt.s32.f32 %v706
      %709 = vmin.xlane.f32.xlu0 %v708
      %v710 = vpop.xlane.xlu0 %709
      %vm711 = vcmp.eq.f32.partialorder %v708, %v710
      %v712 = vsel %vm711, %v707, inf
      %713 = vmin.xlane.f32.xlu0 %v712
      %v714 = vpop.xlane.xlu0 %713
      %v715 = vcvt.f32.s32 %v714
      %v716 = vcvt.f32.s32 %v710
      %v717 = vshll.u32 %v716, 16
      %v718 = vadd.s32 %v717, %v715
      %v719 = vand.u32 %v547, 65535
      %v720 = vshra.s32 %v547, 16
      %v721 = vcvt.s32.f32 %v719
      %v722 = vcvt.s32.f32 %v720
      %723 = vmin.xlane.f32.xlu0 %v722
      %v724 = vpop.xlane.xlu0 %723
      %vm725 = vcmp.eq.f32.partialorder %v722, %v724
      %v726 = vsel %vm725, %v721, inf
      %727 = vmin.xlane.f32.xlu0 %v726
      %v728 = vpop.xlane.xlu0 %727
      %v729 = vcvt.f32.s32 %v728
      %v730 = vcvt.f32.s32 %v724
      %v731 = vshll.u32 %v730, 16
      %v732 = vadd.s32 %v731, %v729
      %v733 = vand.u32 %v548, 65535
      %v734 = vshra.s32 %v548, 16
      %v735 = vcvt.s32.f32 %v733
      %v736 = vcvt.s32.f32 %v734
      %737 = vmin.xlane.f32.xlu0 %v736
      %v738 = vpop.xlane.xlu0 %737
      %vm739 = vcmp.eq.f32.partialorder %v736, %v738
      %v740 = vsel %vm739, %v735, inf
      %741 = vmin.xlane.f32.xlu0 %v740
      %v742 = vpop.xlane.xlu0 %741
      %v743 = vcvt.f32.s32 %v742
      %v744 = vcvt.f32.s32 %v738
      %v745 = vshll.u32 %v744, 16
      %v746 = vadd.s32 %v745, %v743
      %v747 = vand.u32 %v549, 65535
      %v748 = vshra.s32 %v549, 16
      %v749 = vcvt.s32.f32 %v747
      %v750 = vcvt.s32.f32 %v748
      %751 = vmin.xlane.f32.xlu0 %v750
      %v752 = vpop.xlane.xlu0 %751
      %vm753 = vcmp.eq.f32.partialorder %v750, %v752
      %v754 = vsel %vm753, %v749, inf
      %755 = vmin.xlane.f32.xlu0 %v754
      %v756 = vpop.xlane.xlu0 %755
      %v757 = vcvt.f32.s32 %v756
      %v758 = vcvt.f32.s32 %v752
      %v759 = vshll.u32 %v758, 16
      %v760 = vadd.s32 %v759, %v757
      %v761 = vand.u32 %v550, 65535
      %v762 = vshra.s32 %v550, 16
      %v763 = vcvt.s32.f32 %v761
      %v764 = vcvt.s32.f32 %v762
      %765 = vmin.xlane.f32.xlu0 %v764
      %v766 = vpop.xlane.xlu0 %765
      %vm767 = vcmp.eq.f32.partialorder %v764, %v766
      %v768 = vsel %vm767, %v763, inf
      %769 = vmin.xlane.f32.xlu0 %v768
      %v770 = vpop.xlane.xlu0 %769
      %v771 = vcvt.f32.s32 %v770
      %v772 = vcvt.f32.s32 %v766
      %v773 = vshll.u32 %v772, 16
      %v774 = vadd.s32 %v773, %v771
      %v775 = vmax.f32 %v488, -1.0
      %v776 = vmax.f32 %v490, -1.0
      %v777 = vmax.f32 %v492, -1.0
      %v778 = vmax.f32 %v494, -1.0
      %v779 = vmax.f32 %v496, -1.0
      %v780 = vmax.f32 %v498, -1.0
      %v781 = vmax.f32 %v500, -1.0
      %v782 = vmax.f32 %v502, -1.0
      %v783 = vmax.f32 %v504, -1.0
      %v784 = vmax.f32 %v506, -1.0
      %v785 = vmax.f32 %v508, -1.0
      %v786 = vmax.f32 %v510, -1.0
      %v787 = vmax.f32 %v512, -1.0
      %v788 = vmax.f32 %v514, -1.0
      %v789 = vmax.f32 %v516, -1.0
      %v790 = vmax.f32 %v518, -1.0
      %v807 = vlaneseq
      %v808 = vshrl.u32 %v807, 7
      %v809 = vsub.s32 %v366, %v808
      %v810 = vrot.slane %v775, %v809
      %v811 = vadd.s32 %v366, 4294967288
      %v812 = vlaneseq
      %v813 = vshrl.u32 %v812, 7
      %v814 = vsub.s32 %v811, %v813
      %v815 = vrot.slane %v776, %v814
      %vm816 = vcmask 130112
      %v817 = vsel %vm816, %v815, %v810
      %v818 = vadd.s32 %v366, 4294967280
      %v819 = vlaneseq
      %v820 = vshrl.u32 %v819, 7
      %v821 = vsub.s32 %v818, %v820
      %v822 = vrot.slane %v777, %v821
      %vm823 = vcmask 195712
      %v824 = vsel %vm823, %v822, %v817
      %v825 = vadd.s32 %v366, 4294967272
      %v826 = vlaneseq
      %v827 = vshrl.u32 %v826, 7
      %v828 = vsub.s32 %v825, %v827
      %v829 = vrot.slane %v778, %v828
      %vm830 = vcmask 261312
      %v831 = vsel %vm830, %v829, %v824
      %v832 = vadd.s32 %v366, 4294967264
      %v833 = vlaneseq
      %v834 = vshrl.u32 %v833, 7
      %v835 = vsub.s32 %v832, %v834
      %v836 = vrot.slane %v779, %v835
      %vm837 = vcmask 326912
      %v838 = vsel %vm837, %v836, %v831
      %v839 = vadd.s32 %v366, 4294967256
      %v840 = vlaneseq
      %v841 = vshrl.u32 %v840, 7
      %v842 = vsub.s32 %v839, %v841
      %v843 = vrot.slane %v780, %v842
      %vm844 = vcmask 392512
      %v845 = vsel %vm844, %v843, %v838
      %v846 = vadd.s32 %v366, 4294967248
      %v847 = vlaneseq
      %v848 = vshrl.u32 %v847, 7
      %v849 = vsub.s32 %v846, %v848
      %v850 = vrot.slane %v781, %v849
      %vm851 = vcmask 458112
      %v852 = vsel %vm851, %v850, %v845
      %v853 = vadd.s32 %v366, 4294967240
      %v854 = vlaneseq
      %v855 = vshrl.u32 %v854, 7
      %v856 = vsub.s32 %v853, %v855
      %v857 = vrot.slane %v782, %v856
      %vm858 = vcmask 523712
      %v859 = vsel %vm858, %v857, %v852
      %v860 = vadd.s32 %v366, 4294967232
      %v861 = vlaneseq
      %v862 = vshrl.u32 %v861, 7
      %v863 = vsub.s32 %v860, %v862
      %v864 = vrot.slane %v783, %v863
      %vm865 = vcmask 589312
      %v866 = vsel %vm865, %v864, %v859
      %v867 = vadd.s32 %v366, 4294967224
      %v868 = vlaneseq
      %v869 = vshrl.u32 %v868, 7
      %v870 = vsub.s32 %v867, %v869
      %v871 = vrot.slane %v784, %v870
      %vm872 = vcmask 654912
      %v873 = vsel %vm872, %v871, %v866
      %v874 = vadd.s32 %v366, 4294967216
      %v875 = vlaneseq
      %v876 = vshrl.u32 %v875, 7
      %v877 = vsub.s32 %v874, %v876
      %v878 = vrot.slane %v785, %v877
      %vm879 = vcmask 720512
      %v880 = vsel %vm879, %v878, %v873
      %v881 = vadd.s32 %v366, 4294967208
      %v882 = vlaneseq
      %v883 = vshrl.u32 %v882, 7
      %v884 = vsub.s32 %v881, %v883
      %v885 = vrot.slane %v786, %v884
      %vm886 = vcmask 786112
      %v887 = vsel %vm886, %v885, %v880
      %v888 = vadd.s32 %v366, 4294967200
      %v889 = vlaneseq
      %v890 = vshrl.u32 %v889, 7
      %v891 = vsub.s32 %v888, %v890
      %v892 = vrot.slane %v787, %v891
      %vm893 = vcmask 851712
      %v894 = vsel %vm893, %v892, %v887
      %v895 = vadd.s32 %v366, 4294967192
      %v896 = vlaneseq
      %v897 = vshrl.u32 %v896, 7
      %v898 = vsub.s32 %v895, %v897
      %v899 = vrot.slane %v788, %v898
      %vm900 = vcmask 917312
      %v901 = vsel %vm900, %v899, %v894
      %v902 = vadd.s32 %v366, 4294967184
      %v903 = vlaneseq
      %v904 = vshrl.u32 %v903, 7
      %v905 = vsub.s32 %v902, %v904
      %v906 = vrot.slane %v789, %v905
      %vm907 = vcmask 982912
      %v908 = vsel %vm907, %v906, %v901
      %v909 = vadd.s32 %v366, 4294967176
      %v910 = vlaneseq
      %v911 = vshrl.u32 %v910, 7
      %v912 = vsub.s32 %v909, %v911
      %v913 = vrot.slane %v790, %v912
      %vm914 = vcmask 1048512
      %v915 = vsel %vm914, %v913, %v908
      %917 = vst [vmem:[%s199] sm:$0x1] %v915
      %v918 = vlaneseq
      %v919 = vshrl.u32 %v918, 7
      %v920 = vsub.s32 %v366, %v919
      %v921 = vrot.slane %v564, %v920
      %v922 = vlaneseq
      %v923 = vshrl.u32 %v922, 7
      %v924 = vsub.s32 %v811, %v923
      %v925 = vrot.slane %v578, %v924
      %v926 = vsel %vm816, %v925, %v921
      %v927 = vlaneseq
      %v928 = vshrl.u32 %v927, 7
      %v929 = vsub.s32 %v818, %v928
      %v930 = vrot.slane %v592, %v929
      %v931 = vsel %vm823, %v930, %v926
      %v932 = vlaneseq
      %v933 = vshrl.u32 %v932, 7
      %v934 = vsub.s32 %v825, %v933
      %v935 = vrot.slane %v606, %v934
      %v936 = vsel %vm830, %v935, %v931
      %v937 = vlaneseq
      %v938 = vshrl.u32 %v937, 7
      %v939 = vsub.s32 %v832, %v938
      %v940 = vrot.slane %v620, %v939
      %v941 = vsel %vm837, %v940, %v936
      %v942 = vlaneseq
      %v943 = vshrl.u32 %v942, 7
      %v944 = vsub.s32 %v839, %v943
      %v945 = vrot.slane %v634, %v944
      %v946 = vsel %vm844, %v945, %v941
      %v947 = vlaneseq
      %v948 = vshrl.u32 %v947, 7
      %v949 = vsub.s32 %v846, %v948
      %v950 = vrot.slane %v648, %v949
      %v951 = vsel %vm851, %v950, %v946
      %v952 = vlaneseq
      %v953 = vshrl.u32 %v952, 7
      %v954 = vsub.s32 %v853, %v953
      %v955 = vrot.slane %v662, %v954
      %v956 = vsel %vm858, %v955, %v951
      %v957 = vlaneseq
      %v958 = vshrl.u32 %v957, 7
      %v959 = vsub.s32 %v860, %v958
      %v960 = vrot.slane %v676, %v959
      %v961 = vsel %vm865, %v960, %v956
      %v962 = vlaneseq
      %v963 = vshrl.u32 %v962, 7
      %v964 = vsub.s32 %v867, %v963
      %v965 = vrot.slane %v690, %v964
      %v966 = vsel %vm872, %v965, %v961
      %v967 = vlaneseq
      %v968 = vshrl.u32 %v967, 7
      %v969 = vsub.s32 %v874, %v968
      %v970 = vrot.slane %v704, %v969
      %v971 = vsel %vm879, %v970, %v966
      %v972 = vlaneseq
      %v973 = vshrl.u32 %v972, 7
      %v974 = vsub.s32 %v881, %v973
      %v975 = vrot.slane %v718, %v974
      %v976 = vsel %vm886, %v975, %v971
      %v977 = vlaneseq
      %v978 = vshrl.u32 %v977, 7
      %v979 = vsub.s32 %v888, %v978
      %v980 = vrot.slane %v732, %v979
      %v981 = vsel %vm893, %v980, %v976
      %v982 = vlaneseq
      %v983 = vshrl.u32 %v982, 7
      %v984 = vsub.s32 %v895, %v983
      %v985 = vrot.slane %v746, %v984
      %v986 = vsel %vm900, %v985, %v981
      %v987 = vlaneseq
      %v988 = vshrl.u32 %v987, 7
      %v989 = vsub.s32 %v902, %v988
      %v990 = vrot.slane %v760, %v989
      %v991 = vsel %vm907, %v990, %v986
      %v992 = vlaneseq
      %v993 = vshrl.u32 %v992, 7
      %v994 = vsub.s32 %v909, %v993
      %v995 = vrot.slane %v774, %v994
      %v996 = vsel %vm914, %v995, %v991
      %997 = vst [vmem:[%s202] sm:$0x1] %v996
      %p998 = scmp.lt.s32.totalorder %s16, 1
      %s999 = scalar_select %p998, %s16, 1
      %s1000 = scalar_lea.vmem %s3, %s999
      %p1001 = scmp.lt.s32.totalorder %s16, 1
      %s1002 = scalar_select %p1001, %s16, 1
      %s1003 = scalar_lea.vmem %s4, %s1002
      // Predicated region
      $region33: #{feature_match_simple_loss.1} parent=31 // pred_check
        %p1004 = pneg %p102
      $region34: #{feature_match_simple_loss.1} parent=31 // pred_check_branch
        %1006 = sbr.rel (%p1004) target = $region36
      $region35: #{feature_match_simple_loss.1} parent=31 // pred_region
        _
      $region36: #{feature_match_simple_loss.1} parent=31 // pred_fallthru
        _
      // Predicated region
      $region37: #{feature_match_simple_loss.1} parent=31 // pred_check
        %p1007 = pneg %p128
      $region38: #{feature_match_simple_loss.1} parent=31 // pred_check_branch
        %1009 = sbr.rel (%p1007) target = $region40
      $region39: #{feature_match_simple_loss.1} parent=31 // pred_region
        _
      $region40: #{feature_match_simple_loss.1} parent=31 // pred_fallthru
        _
    $region32: #{feature_match_simple_loss.1} parent=5 // pred_fallthru
      _
    %p1010 = scmp.le.s32.totalorder 2, %s11
    // Predicated region
    $region41: #{feature_match_simple_loss.1} parent=5 // pred_check
      %p1011 = pneg %p1010
    $region42: #{feature_match_simple_loss.1} parent=5 // pred_check_branch
      %1013 = sbr.rel (%p1011) target = $region44
    $region43: #{feature_match_simple_loss.1} parent=5 // pred_region
      %s1014 = ssub.s32 %s11, 2
      // Predicated region
      $region45: #{feature_match_simple_loss.1} parent=43 // pred_check
        %p1015 = pneg %p108
      $region46: #{feature_match_simple_loss.1} parent=43 // pred_check_branch
        %1017 = sbr.rel (%p1015) target = $region48
      $region47: #{feature_match_simple_loss.1} parent=43 // pred_region
        %p1018 = scmp.lt.s32.totalorder %s17, 1
        %s1019 = scalar_select %p1018, %s17, 1
        %s1020 = scalar_lea.vmem %s3, %s1019
      $region48: #{feature_match_simple_loss.1} parent=43 // pred_fallthru
        _
      // Predicated region
      $region49: #{feature_match_simple_loss.1} parent=43 // pred_check
        %p1021 = pneg %p134
      $region50: #{feature_match_simple_loss.1} parent=43 // pred_check_branch
        %1023 = sbr.rel (%p1021) target = $region52
      $region51: #{feature_match_simple_loss.1} parent=43 // pred_region
        %p1024 = scmp.lt.s32.totalorder %s17, 1
        %s1025 = scalar_select %p1024, %s17, 1
        %s1026 = scalar_lea.vmem %s4, %s1025
      $region52: #{feature_match_simple_loss.1} parent=43 // pred_fallthru
        _
    $region44: #{feature_match_simple_loss.1} parent=5 // pred_fallthru
      _
  $region6: #{feature_match_simple_loss.1} parent=0 // loop_footer
    %s15 = sadd.s32 1, %s11
  $region7: #{feature_match_simple_loss.1} parent=0 // loop_footer_branch
    %10 = sbr.rel target = $region3
  $region8: #{feature_match_simple_loss.1} parent=0 // loop_exit
    _

</llo_original>
